<compile_context>
chip_gen: v5e
topology: v5e:2x2
jax: 0.10.0
libtpu: 0.0.40
codegen_flags: <defaults>
</compile_context>

<pallas_src>
import math
from functools import partial

import jax
import jax.numpy as jnp
from jax.experimental import pallas as pl
from jax.experimental.pallas import tpu as pltpu

LANE = 128
TN_MAX = 512                        # node (M) tile for the K-tiled path
TK_MAX = 2048                       # reduction (source-node) tile for the K-tiled path
VMEM_LIMIT = 48 * 1024 * 1024       # safe on v5e/v6e (128 MiB) and v7x (64 MiB / TC)
FUSED_VMEM_BUDGET = 40 * 1024 * 1024  # double-buffered working-set budget for fused path


def _round_up(x, m):
    return ((x + m - 1) // m) * m


def _pad2(a, rows, cols):
    r, c = a.shape
    return jnp.pad(a, ((0, rows - r), (0, cols - c)))


# ----------------------------- linear (fc) kernel ---------------------------

def _linear_kernel(x_ref, w_ref, b_ref, o_ref, *, relu):
    # x_ref: (tn, Fin) bf16   w_ref: (Fin, Fout) bf16   b_ref: (1, Fout) f32
    y = jnp.dot(x_ref[...], w_ref[...], preferred_element_type=jnp.float32) + b_ref[...]
    if relu:
        y = jnp.maximum(y, 0.0)
    o_ref[...] = y.astype(o_ref.dtype)


def linear(x, w, b2, *, relu, out_dtype):
    # x: (n_pad, fin) bf16, w: (fin, fout) bf16, b2: (1, fout) f32
    # TODO(synk): K-tile over fin only if nfeat_pad is very large (>= ~8K).
    n_pad, fin = x.shape
    fout = w.shape[1]
    tn = n_pad if n_pad <= TN_MAX else TN_MAX
    assert n_pad % tn == 0
    return pl.pallas_call(
        partial(_linear_kernel, relu=relu),
        out_shape=jax.ShapeDtypeStruct((n_pad, fout), out_dtype),
        grid_spec=pltpu.PrefetchScalarGridSpec(
            num_scalar_prefetch=0,
            grid=(n_pad // tn,),
            in_specs=[
                pl.BlockSpec((tn, fin), lambda i: (i, 0)),
                pl.BlockSpec((fin, fout), lambda i: (0, 0)),
                pl.BlockSpec((1, fout), lambda i: (0, 0)),
            ],
            out_specs=pl.BlockSpec((tn, fout), lambda i: (i, 0)),
        ),
        compiler_params=pltpu.CompilerParams(
            dimension_semantics=("parallel",),
            vmem_limit_bytes=VMEM_LIMIT,
        ),
    )(x, w, b2)


# ------------------- fused multi-layer GCNII kernel (small N) ----------------

def _gcnii_fused_kernel(adj_ref, hin_ref, h0_ref, w_ref, o_ref, h_scr):
    # adj_ref: (n_pad, n_pad) bf16  pre-scaled (1-alpha)*A, resident across all layers
    # hin_ref: (n_pad, F)     bf16  initial h after fc0+ReLU (layer 0 only)
    # h0_ref:  (n_pad, F)     f32   pre-scaled alpha * h0, resident
    # w_ref:   (1, F, F)      bf16  this layer's W_eff = (1-beta)*I + beta*W1
    # h_scr:   (n_pad, F)     bf16  VMEM carry of h across the layer grid axis
    l = pl.program_id(0)

    @pl.when(l == 0)
    def _():
        h_scr[...] = hin_ref[...]

    s = jnp.dot(adj_ref[...], h_scr[...],
                preferred_element_type=jnp.float32) + h0_ref[...]
    h_scr[...] = jnp.maximum(
        jnp.dot(s.astype(w_ref.dtype), w_ref[0],
                preferred_element_type=jnp.float32),
        0.0).astype(h_scr.dtype)

    @pl.when(l == pl.num_programs(0) - 1)
    def _():
        o_ref[...] = h_scr[...]


def gcnii_fused(adj_s, h, h0_scaled, w_stack):
    n_pad, f_pad = h.shape
    n_layers = w_stack.shape[0]
    return pl.pallas_call(
        _gcnii_fused_kernel,
        out_shape=jax.ShapeDtypeStruct((n_pad, f_pad), h.dtype),
        grid_spec=pltpu.PrefetchScalarGridSpec(
            num_scalar_prefetch=0,
            grid=(n_layers,),
            in_specs=[
                pl.BlockSpec((n_pad, n_pad), lambda l: (0, 0)),       # adjacency, resident
                pl.BlockSpec((n_pad, f_pad), lambda l: (0, 0)),       # initial h
                pl.BlockSpec((n_pad, f_pad), lambda l: (0, 0)),       # alpha * h0
                pl.BlockSpec((1, f_pad, f_pad), lambda l: (l, 0, 0)),  # per-layer W_eff
            ],
            out_specs=pl.BlockSpec((n_pad, f_pad), lambda l: (0, 0)),
            scratch_shapes=[pltpu.VMEM((n_pad, f_pad), h.dtype)],
        ),
        compiler_params=pltpu.CompilerParams(
            dimension_semantics=("arbitrary",),   # layers are sequential
            vmem_limit_bytes=VMEM_LIMIT,
        ),
    )(adj_s, h, h0_scaled, w_stack)


def _fused_vmem_bytes(n_pad, f_pad):
    # Double-buffered working-set estimate for the fused path.
    return (2 * n_pad * n_pad * 2        # adjacency (bf16, 2 pipeline buffers)
            + 2 * n_pad * f_pad * 2      # initial h (bf16)
            + 2 * n_pad * f_pad * 4      # alpha * h0 (f32)
            + 2 * f_pad * f_pad * 2      # per-layer W_eff block
            + 2 * n_pad * f_pad * 2      # output (bf16)
            + n_pad * f_pad * 2)         # h carry scratch (bf16)


# -------------- K-tiled, block-sparse GCNII layer kernel (large N) -----------

def _gcnii_tiled_kernel(counts_ref, blkidx_ref, adj_ref, h_ref, h0_ref, w_ref,
                        o_ref, acc_ref):
    # counts_ref: (n_i,)          SMEM  number of nonzero adjacency k-blocks per row tile
    # blkidx_ref: (n_i, max_blk)  SMEM  nonzero k-block indices (drives the index_maps)
    # adj_ref:    (tn, tk)  bf16  pre-scaled (1-alpha)*A tile
    # h_ref:      (tk, F)   bf16  source-node features for this k block
    # h0_ref:     (tn, F)   f32   pre-scaled alpha*h0 tile
    # w_ref:      (F, F)    bf16  W_eff = (1-beta)*I + beta*W1
    # acc_ref:    (tn, F)   f32   VMEM accumulator
    i = pl.program_id(0)
    k = pl.program_id(1)

    @pl.when(k == 0)
    def _():
        acc_ref[...] = h0_ref[...]            # residual-init: alpha * h0 (pre-scaled)

    @pl.when(k < counts_ref[i])               # skip all-zero adjacency blocks
    def _():
        acc_ref[...] += jnp.dot(adj_ref[...], h_ref[...],
                                preferred_element_type=jnp.float32)

    @pl.when(k == pl.num_programs(1) - 1)
    def _():
        s = acc_ref[...].astype(w_ref.dtype)
        o_ref[...] = jnp.maximum(
            jnp.dot(s, w_ref[...], preferred_element_type=jnp.float32),
            0.0).astype(o_ref.dtype)


def gcnii_layer_tiled(graph, h, h0_scaled, w_eff):
    n_pad, f_pad = h.shape
    tn, tk = graph["tn"], graph["tk"]
    n_i = n_pad // tn
    max_blocks = graph["max_blocks"]

    # Index maps are driven by the scalar-prefetched block-index lists.  For steps past
    # counts[i] (or fully-empty row tiles) we clamp to the previous valid block index so
    # the DMA is a revisit (no copy issued); the matmul is skipped by pl.when above.
    def adj_map(i, k, counts_ref, blkidx_ref):
        kk = jnp.maximum(jnp.minimum(k, counts_ref[i] - 1), 0)
        return (i, blkidx_ref[i, kk])

    def h_map(i, k, counts_ref, blkidx_ref):
        kk = jnp.maximum(jnp.minimum(k, counts_ref[i] - 1), 0)
        return (blkidx_ref[i, kk], 0)

    return pl.pallas_call(
        _gcnii_tiled_kernel,
        out_shape=jax.ShapeDtypeStruct((n_pad, f_pad), h.dtype),
        grid_spec=pltpu.PrefetchScalarGridSpec(
            num_scalar_prefetch=2,
            grid=(n_i, max_blocks),
            in_specs=[
                pl.BlockSpec((tn, tk), adj_map),                         # adjacency tile
                pl.BlockSpec((tk, f_pad), h_map),                        # features (k block)
                pl.BlockSpec((tn, f_pad), lambda i, k, c, b: (i, 0)),    # alpha * h0 tile
                pl.BlockSpec((f_pad, f_pad), lambda i, k, c, b: (0, 0)),  # W_eff
            ],
            out_specs=pl.BlockSpec((tn, f_pad), lambda i, k, c, b: (i, 0)),
            scratch_shapes=[pltpu.VMEM((tn, f_pad), jnp.float32)],
        ),
        compiler_params=pltpu.CompilerParams(
            dimension_semantics=("parallel", "arbitrary"),
            vmem_limit_bytes=VMEM_LIMIT,
        ),
    )(graph["counts"], graph["blkidx"], graph["adj_s"], h, h0_scaled, w_eff)


# ------------------------ graph preprocessing (hoisted) ----------------------

def prepare_graph(adj, *, alpha):
    """One-time (per static graph) preprocessing: scale/pad/cast the adjacency and
    build the block-sparsity metadata.  Eager (data-dependent max_blocks)."""
    n = adj.shape[0]
    n128 = _round_up(n, LANE)
    if n128 <= TN_MAX:
        tn = tk = n_pad = n128                    # single tile
    elif n128 <= 4096:
        tn = TN_MAX
        n_pad = _round_up(n128, tn)
        tk = n_pad                                # one K step per row tile
    else:
        tn, tk = TN_MAX, TK_MAX
        n_pad = _round_up(n, tk)                  # tk is a multiple of tn

    adj_p = _pad2(adj.astype(jnp.float32), n_pad, n_pad)
    adj_s = ((1.0 - alpha) * adj_p).astype(jnp.bfloat16)

    # Nonzero-(tn, tk)-block metadata for the K-tiled path (computed on the f32
    # adjacency so bf16 underflow can never drop a contributing block).
    n_i, n_k = n_pad // tn, n_pad // tk
    blk_nz = jnp.abs(adj_p).reshape(n_i, tn, n_k, tk).max(axis=(1, 3)) > 0   # (n_i, n_k)
    counts = blk_nz.sum(axis=1).astype(jnp.int32)                            # (n_i,)
    order = jnp.argsort(jnp.logical_not(blk_nz).astype(jnp.int32), axis=1)   # nz first
    max_blocks = max(int(counts.max()), 1)
    blkidx = order[:, :max_blocks].astype(jnp.int32)                         # (n_i, max_blk)

    return dict(alpha=float(alpha), n=n, n_pad=n_pad, tn=tn, tk=tk,
                adj_s=adj_s, counts=counts, blkidx=blkidx, max_blocks=max_blocks)


# --------------------------- model wrapper / glue ----------------------------

def h_gcnii_forward(params, x, graph_or_adj, *, alpha, lamda, force_tiled=False):
    graph = (graph_or_adj if isinstance(graph_or_adj, dict)
             else prepare_graph(graph_or_adj, alpha=alpha))
    assert abs(graph["alpha"] - alpha) < 1e-9

    N, nfeat = x.shape
    nhidden = params["fc0_w_t"].shape[1]
    nclass = params["fc1_w_t"].shape[1]

    n_pad = graph["n_pad"]
    fin_pad = _round_up(nfeat, LANE)
    hid_pad = _round_up(nhidden, LANE)
    cls_pad = _round_up(nclass, LANE)

    bf16, f32 = jnp.bfloat16, jnp.float32

    x_p = _pad2(x, n_pad, fin_pad).astype(bf16)
    fc0_w = _pad2(params["fc0_w_t"], fin_pad, hid_pad).astype(bf16)
    fc0_b = jnp.pad(params["fc0_b"], (0, hid_pad - nhidden)).reshape(1, hid_pad).astype(f32)
    fc1_w = _pad2(params["fc1_w_t"], hid_pad, cls_pad).astype(bf16)
    fc1_b = jnp.pad(params["fc1_b"], (0, cls_pad - nclass)).reshape(1, cls_pad).astype(f32)

    # fcs[0] + ReLU.  NOTE: padded node rows pick up relu(bias) garbage; this is
    # harmless because the padded adjacency columns are zero and the padded rows are
    # sliced off at the end — do NOT add any column-wise / over-nodes reduction here.
    h = linear(x_p, fc0_w, fc0_b, relu=True, out_dtype=bf16)        # (n_pad, hid_pad)
    h0_scaled = alpha * h.astype(f32)                               # fold alpha once

    # GCNII layers with W_eff = (1-beta)*I + beta*W1 (identity mapping folded in).
    n_layers = len(params["conv_w1"])
    if n_layers > 0:
        eye = jnp.eye(nhidden, dtype=f32)
        w_effs = []
        for l, w1 in enumerate(params["conv_w1"], start=1):
            beta = math.log(lamda / l + 1.0)
            w_effs.append(_pad2((1.0 - beta) * eye + beta * w1, hid_pad, hid_pad))

        use_fused = ((not force_tiled)
                     and _fused_vmem_bytes(n_pad, hid_pad) <= FUSED_VMEM_BUDGET)
        if use_fused:
            # Adjacency resident in VMEM across all layers (DMA'd once).
            w_stack = jnp.stack(w_effs).astype(bf16)                # (L, hid, hid)
            h = gcnii_fused(graph["adj_s"], h, h0_scaled, w_stack)
        else:
            for w_eff in w_effs:
                h = gcnii_layer_tiled(graph, h, h0_scaled, w_eff.astype(bf16))

    # fcs[-1], lane-dense padded output, then slice
    out = linear(h, fc1_w, fc1_b, relu=False, out_dtype=f32)        # (n_pad, cls_pad)
    return out[:N, :nclass]


# -------------------------------- references ---------------------------------

def reference_forward_bf16(params, x, adj, *, alpha, lamda):
    """Pure-JAX reference mirroring the kernel's bf16 casts / f32 accumulation."""
    bf16, f32 = jnp.bfloat16, jnp.float32

    def mm(a, b):
        return jnp.dot(a.astype(bf16), b.astype(bf16), preferred_element_type=f32)

    h = jnp.maximum(mm(x, params["fc0_w_t"]) + params["fc0_b"], 0.0).astype(bf16)
    h0s = alpha * h.astype(f32)
    adj_s = ((1.0 - alpha) * adj).astype(bf16)
    nhidden = params["fc0_w_t"].shape[1]
    eye = jnp.eye(nhidden, dtype=f32)
    for l, w1 in enumerate(params["conv_w1"], start=1):
        beta = math.log(lamda / l + 1.0)
        w_eff = ((1.0 - beta) * eye + beta * w1).astype(bf16)
        s = jnp.dot(adj_s, h, preferred_element_type=f32) + h0s
        h = jnp.maximum(jnp.dot(s.astype(bf16), w_eff, preferred_element_type=f32),
                        0.0).astype(bf16)
    return mm(h, params["fc1_w_t"]) + params["fc1_b"]


def reference_forward_f32(params, x, adj, *, alpha, lamda):
    """Pure-f32 reference matching the original torch module semantics."""
    h = jnp.maximum(x @ params["fc0_w_t"] + params["fc0_b"], 0.0)
    h0 = h
    for l, w1 in enumerate(params["conv_w1"], start=1):
        beta = math.log(lamda / l + 1.0)
        s = (1.0 - alpha) * (adj @ h) + alpha * h0
        h = jnp.maximum((1.0 - beta) * s + beta * (s @ w1), 0.0)
    return h @ params["fc1_w_t"] + params["fc1_b"]


def init_params(key, nfeat, nhidden, nclass, nlayers):
    ks = jax.random.split(key, 4 + nlayers)

    def glorot(k, fan_in, fan_out, shape):
        a = math.sqrt(6.0 / (fan_in + fan_out))
        return jax.random.uniform(k, shape, jnp.float32, -a, a)

    return {
        # stored already transposed: y = x @ W^T + b  ->  W^T has shape (in, out)
        "fc0_w_t": glorot(ks[0], nfeat, nhidden, (nfeat, nhidden)),
        "fc0_b": glorot(ks[1], nhidden, 1, (nhidden,)),
        "fc1_w_t": glorot(ks[2], nhidden, nclass, (nhidden, nclass)),
        "fc1_b": glorot(ks[3], nclass, 1, (nclass,)),
        "conv_w1": [glorot(ks[4 + i], nhidden, nhidden, (nhidden, nhidden))
                    for i in range(nlayers)],
    }


if __name__ == "__main__":
    # Small shapes consistent with the module's forward.
    N_NODES, N_EDGES = 64, 256
    NFEAT, NHIDDEN, NCLASS, NLAYERS = 32, 64, 8, 2
    ALPHA, LAMDA = 0.1, 0.5

    key = jax.random.PRNGKey(0)
    k_x, k_src, k_dst, k_w, k_p = jax.random.split(key, 5)

    x = jax.random.normal(k_x, (N_NODES, NFEAT), jnp.float32)

    # Synthetic graph: edge_index (2, E) + edge_weight (E,), densified to A (N, N)
    src = jax.random.randint(k_src, (N_EDGES,), 0, N_NODES)
    dst = jax.random.randint(k_dst, (N_EDGES,), 0, N_NODES)
    ew = jax.random.uniform(k_w, (N_EDGES,), jnp.float32, 0.1, 1.0)
    adj = jnp.zeros((N_NODES, N_NODES), jnp.float32).at[dst, src].add(ew)

    params = init_params(k_p, NFEAT, NHIDDEN, NCLASS, NLAYERS)

    # Hoisted (one-time) graph preprocessing; reused across forward calls.
    graph = prepare_graph(adj, alpha=ALPHA)

    # Fused small-graph path (adjacency resident across layers) ...
    out_fused = jax.block_until_ready(
        h_gcnii_forward(params, x, graph, alpha=ALPHA, lamda=LAMDA))
    # ... and the K-tiled block-sparse path, forced, to validate both code paths.
    out_tiled = jax.block_until_ready(
        h_gcnii_forward(params, x, graph, alpha=ALPHA, lamda=LAMDA, force_tiled=True))

    assert out_fused.shape == (N_NODES, NCLASS)
    assert out_tiled.shape == (N_NODES, NCLASS)

    ref_bf16 = reference_forward_bf16(params, x, adj, alpha=ALPHA, lamda=LAMDA)
    ref_f32 = reference_forward_f32(params, x, adj, alpha=ALPHA, lamda=LAMDA)

    for name, out in (("fused", out_fused), ("tiled", out_tiled)):
        assert jnp.allclose(out, ref_bf16, rtol=3e-2, atol=3e-2), f"{name}: bf16 ref mismatch"
        assert jnp.allclose(out, ref_f32, rtol=1.5e-1, atol=1.5e-1), f"{name}: f32 ref mismatch"
    assert jnp.allclose(out_fused, out_tiled, rtol=1e-2, atol=1e-2), "fused vs tiled mismatch"

    print("KERNEL_OK")
</pallas_src>

<mosaic_0001>
module attributes {stable_mosaic.version = 11 : i64} {
  func.func @_linear_kernel(%arg0: i32, %arg1: memref<128x128xbf16, #tpu.memory_space<vmem>>, %arg2: memref<128x128xbf16, #tpu.memory_space<vmem>>, %arg3: memref<1x128xf32, #tpu.memory_space<vmem>>, %arg4: memref<128x128xbf16, #tpu.memory_space<vmem>>) attributes {dimension_semantics = [#tpu.dimension_semantics<parallel>], iteration_bounds = array<i64: 1>, scalar_prefetch = 0 : i64, scratch_operands = 0 : i64, tpu.core_type = #tpu.core_type<tc>, window_params = [{transform_indices = @transform_0, window_bounds = array<i64: 128, 128>}, {pipeline_mode = #tpu.pipeline_mode<synchronous>, transform_indices = @transform_1, window_bounds = array<i64: 128, 128>}, {pipeline_mode = #tpu.pipeline_mode<synchronous>, transform_indices = @transform_2, window_bounds = array<i64: 1, 128>}, {transform_indices = @transform_3, window_bounds = array<i64: 128, 128>}]} {
    %c0 = arith.constant 0 : index
    %c0_0 = arith.constant 0 : index
    %0 = vector.load %arg1[%c0, %c0_0] : memref<128x128xbf16, #tpu.memory_space<vmem>>, vector<128x128xbf16>
    %c0_1 = arith.constant 0 : index
    %c0_2 = arith.constant 0 : index
    %1 = vector.load %arg2[%c0_1, %c0_2] : memref<128x128xbf16, #tpu.memory_space<vmem>>, vector<128x128xbf16>
    %cst = arith.constant dense<0.000000e+00> : vector<128x128xf32>
    %2 = tpu.matmul %0, %1, %cst {dimension_numbers = #tpu.dot_dimension_numbers<[1], [0], [0], [1], [0, 0, 1, 1], [], []>} : vector<128x128xbf16>, vector<128x128xbf16>, vector<128x128xf32> -> vector<128x128xf32>
    %c0_3 = arith.constant 0 : index
    %c0_4 = arith.constant 0 : index
    %3 = vector.load %arg3[%c0_3, %c0_4] : memref<1x128xf32, #tpu.memory_space<vmem>>, vector<1x128xf32>
    %4 = vector.broadcast %3 : vector<1x128xf32> to vector<128x128xf32>
    %5 = arith.addf %2, %4 : vector<128x128xf32>
    %cst_5 = arith.constant 0.000000e+00 : f32
    %6 = vector.broadcast %cst_5 : f32 to vector<128x128xf32>
    %7 = arith.maximumf %5, %6 : vector<128x128xf32>
    %8 = arith.truncf %7 : vector<128x128xf32> to vector<128x128xbf16>
    %c0_6 = arith.constant 0 : index
    %c0_7 = arith.constant 0 : index
    %9 = vector.load %arg4[%c0_6, %c0_7] : memref<128x128xbf16, #tpu.memory_space<vmem>>, vector<128x128xbf16>
    tpu.vector_store %arg4[%c0_6, %c0_7], %8 {strides = array<i32>} : memref<128x128xbf16, #tpu.memory_space<vmem>>, vector<128x128xbf16>,
    return
  }
  func.func @transform_0(%arg0: i32) -> (i32, i32) {
    %c0_i32 = arith.constant 0 : i32
    %c0_i32_0 = arith.constant 0 : i32
    return %arg0, %c0_i32 : i32, i32
  }
  func.func @transform_1(%arg0: i32) -> (i32, i32) {
    %c0_i32 = arith.constant 0 : i32
    %c0_i32_0 = arith.constant 0 : i32
    %c0_i32_1 = arith.constant 0 : i32
    return %c0_i32, %c0_i32_0 : i32, i32
  }
  func.func @transform_2(%arg0: i32) -> (i32, i32) {
    %c0_i32 = arith.constant 0 : i32
    %c0_i32_0 = arith.constant 0 : i32
    %c0_i32_1 = arith.constant 0 : i32
    return %c0_i32, %c0_i32_0 : i32, i32
  }
  func.func @transform_3(%arg0: i32) -> (i32, i32) {
    %c0_i32 = arith.constant 0 : i32
    %c0_i32_0 = arith.constant 0 : i32
    return %arg0, %c0_i32 : i32, i32
  }
}

</mosaic_0001>

<llo_original>
// kernel: tpu_custom_call.1
$region0: #{tpu_custom_call.1}
  #allocation0 [shape = 'u32[]', space=smem, size = 0x4, offset = 0x4, fixed_abs, tag = 'smem constant byte address 0x4 - core index']
  #allocation1 [shape = 'u32[72,128]{1,0:T(1,128)}', space=vmem, size = 0x9000, scoped, tag = 'internal scratch']
  %s0 = inlined_call_operand.hbm [shape: bf16[128,128], index: 0, kind: input, shape index: {}]
  %s1 = inlined_call_operand.hbm [shape: bf16[128,128], index: 1, kind: input, shape index: {}]
  %s2 = inlined_call_operand.vmem [shape: f32[1,128], index: 2, kind: input, shape index: {}]
  %s3 = inlined_call_operand.hbm [shape: bf16[128,128], index: 3, kind: output, shape index: {}]
  %s4 = sld [smem:[#allocation0]]
  $region30: #{tpu_custom_call.1} parent=0
    _
  %s6 = ssub.s32 1, %s4
  %s7 = scalar_select 0, %s6, %s4
  $region1: #{tpu_custom_call.1} parent=0
    #allocation2 [shape = 'u8[32768]{0}', space=vmem, size = 0x8000, scoped, tag = 'input window, operand 0, single buffered']
    #allocation3 [shape = 's32[1]{0}', space=sflag, size = 0x4, scoped, tag = 'scoped memory for tpu_custom_call.1']
    #allocation4 [shape = 's32[1]{0}', space=sflag, size = 0x4, scoped, tag = 'scoped memory for tpu_custom_call.1']
    #allocation5 [shape = 'u8[32768]{0}', space=vmem, size = 0x8000, scoped, tag = 'input window, operand 1, single buffered']
    #allocation6 [shape = 's32[1]{0}', space=sflag, size = 0x4, scoped, tag = 'scoped memory for tpu_custom_call.1']
    #allocation7 [shape = 'u8[32768]{0}', space=vmem, size = 0x8000, scoped, tag = 'output window, operand 0, single buffered']
    %8 = vsyncpa [#allocation3], 0
    %9 = vsyncpa [#allocation6], 0
    %10 = vsyncpa [#allocation4], 0
    // Predicated region
    $region2: #{tpu_custom_call.1} parent=1 // pred_check
      _
    $region3: #{tpu_custom_call.1} parent=1 // pred_check_branch
      %12 = sbr.rel (0) target = $region5
    $region4: #{tpu_custom_call.1} parent=1 // pred_region
      %14 = vsyncadd [#allocation3], 0
      %s15 = sshll.u32 %s0, 4
      %s16 = int_to_ptr.hbm [resolvable:$true] %s15
      %s17 = sshll.u32 [#allocation2], 4
      %s18 = int_to_ptr.vmem [resolvable:$true] %s17
      %23 = dma.hbm_to_vmem [thread:$0]  %s16, 1024, %s18, [#allocation3], 64, 64, 4
    $region5: #{tpu_custom_call.1} parent=1 // pred_fallthru
      _
    // Predicated region
    $region6: #{tpu_custom_call.1} parent=1 // pred_check
      _
    $region7: #{tpu_custom_call.1} parent=1 // pred_check_branch
      %25 = sbr.rel (0) target = $region9
    $region8: #{tpu_custom_call.1} parent=1 // pred_region
      %27 = vsyncadd [#allocation6], 0
      %s28 = sshll.u32 %s1, 4
      %s29 = int_to_ptr.hbm [resolvable:$true] %s28
      %s30 = sshll.u32 [#allocation5], 4
      %s31 = int_to_ptr.vmem [resolvable:$true] %s30
      %36 = dma.hbm_to_vmem [thread:$0]  %s29, 1024, %s31, [#allocation6], 64, 64, 4
    $region9: #{tpu_custom_call.1} parent=1 // pred_fallthru
      _
    // Predicated region
    $region10: #{tpu_custom_call.1} parent=1 // pred_check
      _
    $region11: #{tpu_custom_call.1} parent=1 // pred_check_branch
      %38 = sbr.rel (0) target = $region13
    $region12: #{tpu_custom_call.1} parent=1 // pred_region
      _
    $region13: #{tpu_custom_call.1} parent=1 // pred_fallthru
      _
    // Predicated region
    $region14: #{tpu_custom_call.1} parent=1 // pred_check
      _
    $region15: #{tpu_custom_call.1} parent=1 // pred_check_branch
      %40 = sbr.rel (0) target = $region17
    $region16: #{tpu_custom_call.1} parent=1 // pred_region
      %42 = dma.done [#allocation3], 1024
    $region17: #{tpu_custom_call.1} parent=1 // pred_fallthru
      _
    // Predicated region
    $region18: #{tpu_custom_call.1} parent=1 // pred_check
      _
    $region19: #{tpu_custom_call.1} parent=1 // pred_check_branch
      %44 = sbr.rel (0) target = $region21
    $region20: #{tpu_custom_call.1} parent=1 // pred_region
      %46 = dma.done [#allocation6], 1024
    $region21: #{tpu_custom_call.1} parent=1 // pred_fallthru
      _
    %v47 = vld [vmem:[#allocation2] sm:$0xf]
    %v48 = vld [vmem:[#allocation2 + $0x4] sm:$0xf]
    %v49 = vld [vmem:[#allocation2 + $0x8] sm:$0xf]
    %v50 = vld [vmem:[#allocation2 + $0xc] sm:$0xf]
    %v51 = vld [vmem:[#allocation2 + $0x10] sm:$0xf]
    %v52 = vld [vmem:[#allocation2 + $0x14] sm:$0xf]
    %v53 = vld [vmem:[#allocation2 + $0x18] sm:$0xf]
    %v54 = vld [vmem:[#allocation2 + $0x1c] sm:$0xf]
    %v55 = vld [vmem:[#allocation2 + $0x20] sm:$0xf]
    %v56 = vld [vmem:[#allocation2 + $0x24] sm:$0xf]
    %v57 = vld [vmem:[#allocation2 + $0x28] sm:$0xf]
    %v58 = vld [vmem:[#allocation2 + $0x2c] sm:$0xf]
    %v59 = vld [vmem:[#allocation2 + $0x30] sm:$0xf]
    %v60 = vld [vmem:[#allocation2 + $0x34] sm:$0xf]
    %v61 = vld [vmem:[#allocation2 + $0x38] sm:$0xf]
    %v62 = vld [vmem:[#allocation2 + $0x3c] sm:$0xf]
    %v63 = vld [vmem:[#allocation5] sm:$0xf]
    %v64 = vld [vmem:[#allocation5 + $0x4] sm:$0xf]
    %v65 = vld [vmem:[#allocation5 + $0x8] sm:$0xf]
    %v66 = vld [vmem:[#allocation5 + $0xc] sm:$0xf]
    %v67 = vld [vmem:[#allocation5 + $0x10] sm:$0xf]
    %v68 = vld [vmem:[#allocation5 + $0x14] sm:$0xf]
    %v69 = vld [vmem:[#allocation5 + $0x18] sm:$0xf]
    %v70 = vld [vmem:[#allocation5 + $0x1c] sm:$0xf]
    %v71 = vld [vmem:[#allocation5 + $0x20] sm:$0xf]
    %v72 = vld [vmem:[#allocation5 + $0x24] sm:$0xf]
    %v73 = vld [vmem:[#allocation5 + $0x28] sm:$0xf]
    %v74 = vld [vmem:[#allocation5 + $0x2c] sm:$0xf]
    %v75 = vld [vmem:[#allocation5 + $0x30] sm:$0xf]
    %v76 = vld [vmem:[#allocation5 + $0x34] sm:$0xf]
    %v77 = vld [vmem:[#allocation5 + $0x38] sm:$0xf]
    %v78 = vld [vmem:[#allocation5 + $0x3c] sm:$0xf]
    %v79 = vld [vmem:[%s2] sm:$0x1]
    %v81 = vperm.slane %v79, 0
    %v99 = vunpack.c.l.b16 %v47
    %v100 = vunpack.c.l.b16 %v48
    %v101 = vunpack.c.l.b16 %v49
    %v102 = vunpack.c.l.b16 %v50
    %v103 = vunpack.c.l.b16 %v51
    %v104 = vunpack.c.l.b16 %v52
    %v105 = vunpack.c.l.b16 %v53
    %v106 = vunpack.c.l.b16 %v54
    %v107 = vunpack.c.l.b16 %v55
    %v108 = vunpack.c.l.b16 %v56
    %v109 = vunpack.c.l.b16 %v57
    %v110 = vunpack.c.l.b16 %v58
    %v111 = vunpack.c.l.b16 %v59
    %v112 = vunpack.c.l.b16 %v60
    %v113 = vunpack.c.l.b16 %v61
    %v114 = vunpack.c.l.b16 %v62
    %v115 = vpack.c.b16 %v100, %v99
    %v116 = vpack.c.b16 %v102, %v101
    %v117 = vpack.c.b16 %v104, %v103
    %v118 = vpack.c.b16 %v106, %v105
    %v119 = vpack.c.b16 %v108, %v107
    %v120 = vpack.c.b16 %v110, %v109
    %v121 = vpack.c.b16 %v112, %v111
    %v122 = vpack.c.b16 %v114, %v113
    %v147 = vunpack.c.l.b16 %v63
    %v148 = vunpack.c.l.b16 %v64
    %v149 = vunpack.c.l.b16 %v65
    %v150 = vunpack.c.l.b16 %v66
    %v151 = vunpack.c.l.b16 %v67
    %v152 = vunpack.c.l.b16 %v68
    %v153 = vunpack.c.l.b16 %v69
    %v154 = vunpack.c.l.b16 %v70
    %v155 = vunpack.c.l.b16 %v71
    %v156 = vunpack.c.l.b16 %v72
    %v157 = vunpack.c.l.b16 %v73
    %v158 = vunpack.c.l.b16 %v74
    %v159 = vunpack.c.l.b16 %v75
    %v160 = vunpack.c.l.b16 %v76
    %v161 = vunpack.c.l.b16 %v77
    %v162 = vunpack.c.l.b16 %v78
    %v163 = vpack.c.b16 %v148, %v147
    %v164 = vpack.c.b16 %v150, %v149
    %v165 = vpack.c.b16 %v152, %v151
    %v166 = vpack.c.b16 %v154, %v153
    %v167 = vpack.c.b16 %v156, %v155
    %v168 = vpack.c.b16 %v158, %v157
    %v169 = vpack.c.b16 %v160, %v159
    %v170 = vpack.c.b16 %v162, %v161
    %179 = vmatpush.bf16.msra.mxu0 %v170
    %180 = vmatpush.bf16.msra.mxu0 %v169
    %181 = vmatpush.bf16.msra.mxu0 %v168
    %182 = vmatpush.bf16.msra.mxu0 %v167
    %183 = vmatpush.bf16.msra.mxu0 %v166
    %184 = vmatpush.bf16.msra.mxu0 %v165
    %185 = vmatpush.bf16.msra.mxu0 %v164
    %186 = vmatpush.bf16.msra.mxu0 %v163
    %187 = vmatmul.bf16.gmra.mxu0 %v115
    %v188 = vpop.f32.mrf.mxu0
    %v189 = vadd.f32 %v81, %v188
    %v190 = vpop.f32.mrf.mxu0
    %v191 = vadd.f32 %v81, %v190
    %192 = vmatmul.bf16.gmra.mxu0 %v116
    %v193 = vpop.f32.mrf.mxu0
    %v194 = vadd.f32 %v81, %v193
    %v195 = vpop.f32.mrf.mxu0
    %v196 = vadd.f32 %v81, %v195
    %197 = vmatmul.bf16.gmra.mxu0 %v117
    %v198 = vpop.f32.mrf.mxu0
    %v199 = vadd.f32 %v81, %v198
    %v200 = vpop.f32.mrf.mxu0
    %v201 = vadd.f32 %v81, %v200
    %202 = vmatmul.bf16.gmra.mxu0 %v118
    %v203 = vpop.f32.mrf.mxu0
    %v204 = vadd.f32 %v81, %v203
    %v205 = vpop.f32.mrf.mxu0
    %v206 = vadd.f32 %v81, %v205
    %207 = vmatmul.bf16.gmra.mxu0 %v119
    %v208 = vpop.f32.mrf.mxu0
    %v209 = vadd.f32 %v81, %v208
    %v210 = vpop.f32.mrf.mxu0
    %v211 = vadd.f32 %v81, %v210
    %212 = vmatmul.bf16.gmra.mxu0 %v120
    %v213 = vpop.f32.mrf.mxu0
    %v214 = vadd.f32 %v81, %v213
    %v215 = vpop.f32.mrf.mxu0
    %v216 = vadd.f32 %v81, %v215
    %217 = vmatmul.bf16.gmra.mxu0 %v121
    %v218 = vpop.f32.mrf.mxu0
    %v219 = vadd.f32 %v81, %v218
    %v220 = vpop.f32.mrf.mxu0
    %v221 = vadd.f32 %v81, %v220
    %222 = vmatmul.bf16.gmra.mxu0 %v122
    %v223 = vpop.f32.mrf.mxu0
    %v224 = vadd.f32 %v81, %v223
    %v225 = vpop.f32.mrf.mxu0
    %v226 = vadd.f32 %v81, %v225
    %227 = vdwg.mxu0
    %v228 = vmax.f32 %v189, 0.0
    %v229 = vmax.f32 %v191, 0.0
    %v230 = vmax.f32 %v194, 0.0
    %v231 = vmax.f32 %v196, 0.0
    %v232 = vmax.f32 %v199, 0.0
    %v233 = vmax.f32 %v201, 0.0
    %v234 = vmax.f32 %v204, 0.0
    %v235 = vmax.f32 %v206, 0.0
    %v236 = vmax.f32 %v209, 0.0
    %v237 = vmax.f32 %v211, 0.0
    %v238 = vmax.f32 %v214, 0.0
    %v239 = vmax.f32 %v216, 0.0
    %v240 = vmax.f32 %v219, 0.0
    %v241 = vmax.f32 %v221, 0.0
    %v242 = vmax.f32 %v224, 0.0
    %v243 = vmax.f32 %v226, 0.0
    %v244 = vpack.c.bf16 %v228, %v228
    %v245 = vpack.c.bf16 %v229, %v229
    %v246 = vpack.c.bf16 %v230, %v230
    %v247 = vpack.c.bf16 %v231, %v231
    %v248 = vpack.c.bf16 %v232, %v232
    %v249 = vpack.c.bf16 %v233, %v233
    %v250 = vpack.c.bf16 %v234, %v234
    %v251 = vpack.c.bf16 %v235, %v235
    %v252 = vpack.c.bf16 %v236, %v236
    %v253 = vpack.c.bf16 %v237, %v237
    %v254 = vpack.c.bf16 %v238, %v238
    %v255 = vpack.c.bf16 %v239, %v239
    %v256 = vpack.c.bf16 %v240, %v240
    %v257 = vpack.c.bf16 %v241, %v241
    %v258 = vpack.c.bf16 %v242, %v242
    %v259 = vpack.c.bf16 %v243, %v243
    %260 = vst [vmem:[#allocation7] sm:$0xf] %v244
    %261 = vst [vmem:[#allocation7 + $0x4] sm:$0xf] %v245
    %262 = vst [vmem:[#allocation7 + $0x8] sm:$0xf] %v246
    %263 = vst [vmem:[#allocation7 + $0xc] sm:$0xf] %v247
    %264 = vst [vmem:[#allocation7 + $0x10] sm:$0xf] %v248
    %265 = vst [vmem:[#allocation7 + $0x14] sm:$0xf] %v249
    %266 = vst [vmem:[#allocation7 + $0x18] sm:$0xf] %v250
    %267 = vst [vmem:[#allocation7 + $0x1c] sm:$0xf] %v251
    %268 = vst [vmem:[#allocation7 + $0x20] sm:$0xf] %v252
    %269 = vst [vmem:[#allocation7 + $0x24] sm:$0xf] %v253
    %270 = vst [vmem:[#allocation7 + $0x28] sm:$0xf] %v254
    %271 = vst [vmem:[#allocation7 + $0x2c] sm:$0xf] %v255
    %272 = vst [vmem:[#allocation7 + $0x30] sm:$0xf] %v256
    %273 = vst [vmem:[#allocation7 + $0x34] sm:$0xf] %v257
    %274 = vst [vmem:[#allocation7 + $0x38] sm:$0xf] %v258
    %275 = vst [vmem:[#allocation7 + $0x3c] sm:$0xf] %v259
    // Predicated region
    $region22: #{tpu_custom_call.1} parent=1 // pred_check
      _
    $region23: #{tpu_custom_call.1} parent=1 // pred_check_branch
      %277 = sbr.rel (0) target = $region25
    $region24: #{tpu_custom_call.1} parent=1 // pred_region
      %279 = vsyncadd [#allocation4], 0
      %s280 = sshll.u32 [#allocation7], 4
      %s281 = int_to_ptr.vmem [resolvable:$true] %s280
      %s282 = sshll.u32 %s3, 4
      %s283 = int_to_ptr.hbm [resolvable:$true] %s282
      %288 = dma.vmem_to_hbm [thread:$0]  %s281, 1024, %s283, [#allocation4], 64, 64, 4
    $region25: #{tpu_custom_call.1} parent=1 // pred_fallthru
      _
    // Predicated region
    $region26: #{tpu_custom_call.1} parent=1 // pred_check
      _
    $region27: #{tpu_custom_call.1} parent=1 // pred_check_branch
      %290 = sbr.rel (0) target = $region29
    $region28: #{tpu_custom_call.1} parent=1 // pred_region
      %292 = dma.done [#allocation4], 1024
    $region29: #{tpu_custom_call.1} parent=1 // pred_fallthru
      _
    %293 = vsyncpa [#allocation3], 1
    %294 = vsyncpa [#allocation6], 1
    %295 = vsyncpa [#allocation4], 1

</llo_original>
